<compile_context>
chip_gen: v5e
topology: v5e:2x2
jax: 0.10.0
libtpu: 0.0.40
codegen_flags: <defaults>
</compile_context>

<pallas_src>
import functools

import jax
import jax.numpy as jnp
from jax import lax
from jax.experimental import pallas as pl
from jax.experimental.pallas import tpu as pltpu


def _round_up(n: int, m: int) -> int:
    return ((n + m - 1) // m) * m


def _pick_vmem_limit(need_bytes: int) -> int:
    """Size the scoped-VMEM limit from actual buffer bytes, generation-safe."""
    limit = int(need_bytes * 1.5) + (2 << 20)     # 1.5x + 2 MiB margin
    limit = max(limit, 16 << 20)                  # sane floor
    try:
        cap = int(pltpu.get_tpu_info().vmem_capacity_bytes)
    except Exception:
        cap = 64 << 20                            # v7x per-TC physical (lowest)
    return min(limit, (cap * 3) // 4)             # leave headroom for compiler


def rnn_kernel(x_ref, w_ih_t_ref, w_hh_t_ref, b_ref, w_ho_t_ref, b_ho_ref,
               out_ref, p_scratch, h_scratch, *,
               seq_len: int, chunk_steps: int, batch_pad: int,
               unroll: int, has_tail: bool):
    """Per-chunk body.
       x_ref:    (chunk_steps*Bp, Ip)   chunk of timesteps (time-major rows)
       w_ih_t:   (Ip, Hp)   w_hh_t: (Hp, Hp)   b: (1, Hp) = b_ih + b_hh
       w_ho_t:   (Hp, Op)   b_ho: (1, Op)      out: (Bp, Op)
       p_scratch:(chunk_steps*Bp, Hp) f32 — hoisted input projection
       h_scratch:(Bp, Hp) f32 — hidden state carried across grid steps."""
    c = pl.program_id(0)

    @pl.when(c == 0)
    def _():
        h_scratch[...] = jnp.zeros_like(h_scratch)   # h_0 = 0

    # ---- Phase 1 (per chunk): input projection, one big MXU matmul ----
    p_scratch[...] = (
        jnp.dot(x_ref[...], w_ih_t_ref[...], preferred_element_type=jnp.float32)
        + b_ref[...]                                  # (1, Hp) broadcast
    )

    base_t = c * chunk_steps

    # ---- Phase 2: serial recurrence inside the chunk ----
    # W_hh^T is read from VMEM inside the body (not pinned in vregs across
    # the unrolled loop).
    # TODO(synk): weight-stationary MXU (pltpu.matmul_push_rhs/acc_lhs/pop)
    # would avoid re-pushing the (Hp,Hp) weight tile every timestep.
    def step(t, h):
        off = pl.multiple_of(t * batch_pad, batch_pad)   # sublane-aligned rows
        p_t = p_scratch[pl.ds(off, batch_pad), :]        # (Bp, Hp)
        new_h = jnp.tanh(
            p_t + jnp.dot(h, w_hh_t_ref[...],
                          preferred_element_type=jnp.float32))
        if has_tail:
            # Padded tail timesteps (beyond the true seq_len) are a no-op.
            new_h = jnp.where(base_t + t < seq_len, new_h, h)
        return new_h

    h = lax.fori_loop(0, chunk_steps, step, h_scratch[...], unroll=unroll)
    h_scratch[...] = h

    # ---- Phase 3: fused linear head on the final hidden state ----
    @pl.when(c == pl.num_programs(0) - 1)
    def _():
        out_ref[...] = (
            jnp.dot(h, w_ho_t_ref[...], preferred_element_type=jnp.float32)
            + b_ho_ref[...]
        ).astype(out_ref.dtype)


@functools.partial(jax.jit, static_argnames=("phase1_bf16", "max_chunk_steps"))
def rnn_model_forward(x, w_ih, w_hh, b_ih, b_hh, w_ho, b_ho,
                      *, phase1_bf16=False, max_chunk_steps=256):
    """x: (seq_len, batch, input_size) f32.  Returns (batch, output_size) f32."""
    seq_len, batch, input_size = x.shape
    hidden_size = w_ih.shape[0]
    output_size = w_ho.shape[0]

    # Hardware-tile padding: sublane multiple for batch, lane multiple for the
    # contracted / output feature dims.
    b_pad = _round_up(batch, 8)
    i_pad = _round_up(input_size, 128)
    h_pad = _round_up(hidden_size, 128)
    o_pad = _round_up(output_size, 128)

    in_dtype = jnp.bfloat16 if phase1_bf16 else jnp.float32
    in_bytes = 2 if phase1_bf16 else 4

    # ---- time-chunking: keep the per-chunk x slab + projection small so the
    # kernel VMEM footprint is O(chunk) and the x DMA pipelines per chunk. ----
    per_step_bytes = b_pad * i_pad * in_bytes + b_pad * h_pad * 4
    target_chunk_bytes = 2 << 20
    chunk_steps = max(1, target_chunk_bytes // max(per_step_bytes, 1))
    chunk_steps = int(min(chunk_steps, seq_len, max_chunk_steps))
    num_chunks = -(-seq_len // chunk_steps)
    seq_pad = num_chunks * chunk_steps
    has_tail = seq_pad != seq_len
    unroll = int(min(chunk_steps, 8))

    # Pre-transpose weights, pre-sum biases, zero-pad everything (one-time ops
    # outside the serial chain; zero padding keeps padded hidden lanes at 0).
    x_p = jnp.pad(x, ((0, seq_pad - seq_len),
                      (0, b_pad - batch),
                      (0, i_pad - input_size)))
    x_p = x_p.reshape(seq_pad * b_pad, i_pad).astype(in_dtype)

    w_ih_t = jnp.pad(w_ih.T, ((0, i_pad - input_size),
                              (0, h_pad - hidden_size))).astype(in_dtype)
    w_hh_t = jnp.pad(w_hh.T, ((0, h_pad - hidden_size),
                              (0, h_pad - hidden_size)))
    b_sum = jnp.pad(b_ih + b_hh, (0, h_pad - hidden_size)).reshape(1, h_pad)
    w_ho_t = jnp.pad(w_ho.T, ((0, h_pad - hidden_size),
                              (0, o_pad - output_size)))
    b_ho_p = jnp.pad(b_ho, (0, o_pad - output_size)).reshape(1, o_pad)

    # Size the VMEM limit from the actual buffers (x2 for double-buffering of
    # pipelined/constant inputs and the output, plus scratches).
    x_block_bytes = chunk_steps * b_pad * i_pad * in_bytes
    weight_bytes = (i_pad * h_pad * in_bytes + h_pad * h_pad * 4 + h_pad * 4
                    + h_pad * o_pad * 4 + o_pad * 4)
    out_bytes = b_pad * o_pad * 4
    scratch_bytes = chunk_steps * b_pad * h_pad * 4 + b_pad * h_pad * 4
    need = 2 * x_block_bytes + 2 * weight_bytes + 2 * out_bytes + scratch_bytes
    vmem_limit = _pick_vmem_limit(need)

    kernel = functools.partial(
        rnn_kernel, seq_len=seq_len, chunk_steps=chunk_steps,
        batch_pad=b_pad, unroll=unroll, has_tail=has_tail)

    out_pad = pl.pallas_call(
        kernel,
        out_shape=jax.ShapeDtypeStruct((b_pad, o_pad), jnp.float32),
        grid_spec=pltpu.PrefetchScalarGridSpec(
            num_scalar_prefetch=0,
            grid=(num_chunks,),
            in_specs=[
                # x: per-chunk time block, pipelined HBM->VMEM by Pallas.
                pl.BlockSpec((chunk_steps * b_pad, i_pad), lambda c: (c, 0)),
                # Weights / biases: constant block index -> DMA'd once.
                pl.BlockSpec((i_pad, h_pad), lambda c: (0, 0)),
                pl.BlockSpec((h_pad, h_pad), lambda c: (0, 0)),
                pl.BlockSpec((1, h_pad), lambda c: (0, 0)),
                pl.BlockSpec((h_pad, o_pad), lambda c: (0, 0)),
                pl.BlockSpec((1, o_pad), lambda c: (0, 0)),
            ],
            out_specs=pl.BlockSpec((b_pad, o_pad), lambda c: (0, 0)),
            scratch_shapes=[
                pltpu.VMEM((chunk_steps * b_pad, h_pad), jnp.float32),  # P
                pltpu.VMEM((b_pad, h_pad), jnp.float32),                # h carry
            ],
        ),
        compiler_params=pltpu.CompilerParams(
            dimension_semantics=("arbitrary",),   # serial recurrence over chunks
            vmem_limit_bytes=vmem_limit,
        ),
    )(x_p, w_ih_t, w_hh_t, b_sum, w_ho_t, b_ho_p)

    return out_pad[:batch, :output_size]


def reference_forward(x, w_ih, w_hh, b_ih, b_hh, w_ho, b_ho):
    """Pure-JAX reference matching PyTorch nn.RNN(tanh) + Linear semantics."""
    seq_len, batch, _ = x.shape
    h = jnp.zeros((batch, w_ih.shape[0]), jnp.float32)
    for t in range(seq_len):
        h = jnp.tanh(x[t] @ w_ih.T + b_ih + h @ w_hh.T + b_hh)
    return h @ w_ho.T + b_ho


if __name__ == "__main__":
    # Small shapes consistent with the module's forward.
    seq_len, batch = 8, 2
    input_size, hidden_size, output_size = 16, 32, 8

    key = jax.random.PRNGKey(0)
    ks = jax.random.split(key, 8)
    bound = 1.0 / (hidden_size ** 0.5)

    # Deterministic synthetic parameters (PyTorch-style uniform init ranges).
    w_ih = jax.random.uniform(ks[0], (hidden_size, input_size), jnp.float32,
                              -bound, bound)
    w_hh = jax.random.uniform(ks[1], (hidden_size, hidden_size), jnp.float32,
                              -bound, bound)
    b_ih = jax.random.uniform(ks[2], (hidden_size,), jnp.float32, -bound, bound)
    b_hh = jax.random.uniform(ks[3], (hidden_size,), jnp.float32, -bound, bound)
    w_ho = jax.random.uniform(ks[4], (output_size, hidden_size), jnp.float32,
                              -bound, bound)
    b_ho = jax.random.uniform(ks[5], (output_size,), jnp.float32, -bound, bound)

    x = jax.random.normal(ks[6], (seq_len, batch, input_size), jnp.float32)

    # 1) Default f32 path (single chunk at this size): bit-tight vs reference.
    out = jax.block_until_ready(
        rnn_model_forward(x, w_ih, w_hh, b_ih, b_hh, w_ho, b_ho))
    ref = reference_forward(x, w_ih, w_hh, b_ih, b_hh, w_ho, b_ho)
    assert out.shape == (batch, output_size)
    assert jnp.allclose(out, ref, atol=1e-5, rtol=1e-5), (out, ref)

    # 2) Multi-chunk path with a ragged tail (forces the time-chunked pipeline,
    #    the carried-h scratch and the tail masking): seq=20, chunks of 6.
    x_long = jax.random.normal(ks[7], (20, batch, input_size), jnp.float32)
    out_long = jax.block_until_ready(
        rnn_model_forward(x_long, w_ih, w_hh, b_ih, b_hh, w_ho, b_ho,
                          max_chunk_steps=6))
    ref_long = reference_forward(x_long, w_ih, w_hh, b_ih, b_hh, w_ho, b_ho)
    assert jnp.allclose(out_long, ref_long, atol=1e-5, rtol=1e-5), (out_long,
                                                                    ref_long)

    # 3) bf16 Phase-1 path (bulk input-projection matmul in bf16, recurrence
    #    and head stay f32): looser tolerance.
    out_bf16 = jax.block_until_ready(
        rnn_model_forward(x, w_ih, w_hh, b_ih, b_hh, w_ho, b_ho,
                          phase1_bf16=True))
    assert jnp.allclose(out_bf16, ref, atol=1e-1, rtol=1e-1), (out_bf16, ref)

    print("KERNEL_OK")
</pallas_src>

<mosaic_0001>
module attributes {stable_mosaic.version = 11 : i64} {
  func.func @rnn_kernel(%arg0: i32, %arg1: memref<64x128xf32, #tpu.memory_space<vmem>>, %arg2: memref<128x128xf32, #tpu.memory_space<vmem>>, %arg3: memref<128x128xf32, #tpu.memory_space<vmem>>, %arg4: memref<1x128xf32, #tpu.memory_space<vmem>>, %arg5: memref<128x128xf32, #tpu.memory_space<vmem>>, %arg6: memref<1x128xf32, #tpu.memory_space<vmem>>, %arg7: memref<8x128xf32, #tpu.memory_space<vmem>>, %arg8: memref<64x128xf32, #tpu.memory_space<vmem>>, %arg9: memref<8x128xf32, #tpu.memory_space<vmem>>) attributes {dimension_semantics = [#tpu.dimension_semantics<arbitrary>], iteration_bounds = array<i64: 1>, scalar_prefetch = 0 : i64, scratch_operands = 2 : i64, tpu.core_type = #tpu.core_type<tc>, window_params = [{transform_indices = @transform_0, window_bounds = array<i64: 64, 128>}, {pipeline_mode = #tpu.pipeline_mode<synchronous>, transform_indices = @transform_1, window_bounds = array<i64: 128, 128>}, {pipeline_mode = #tpu.pipeline_mode<synchronous>, transform_indices = @transform_2, window_bounds = array<i64: 128, 128>}, {pipeline_mode = #tpu.pipeline_mode<synchronous>, transform_indices = @transform_3, window_bounds = array<i64: 1, 128>}, {pipeline_mode = #tpu.pipeline_mode<synchronous>, transform_indices = @transform_4, window_bounds = array<i64: 128, 128>}, {pipeline_mode = #tpu.pipeline_mode<synchronous>, transform_indices = @transform_5, window_bounds = array<i64: 1, 128>}, {pipeline_mode = #tpu.pipeline_mode<synchronous>, transform_indices = @transform_6, window_bounds = array<i64: 8, 128>}]} {
    %c0_i32 = arith.constant 0 : i32
    %0 = arith.cmpi eq, %arg0, %c0_i32 : i32
    %1 = arith.extui %0 : i1 to i32
    %c0_i32_0 = arith.constant 0 : i32
    %2 = arith.cmpi ne, %1, %c0_i32_0 : i32
    scf.if %2 {
      %cst_55 = arith.constant 0.000000e+00 : f32
      %79 = vector.broadcast %cst_55 : f32 to vector<8x128xf32>
      %c0_56 = arith.constant 0 : index
      %c0_57 = arith.constant 0 : index
      %80 = vector.load %arg9[%c0_56, %c0_57] : memref<8x128xf32, #tpu.memory_space<vmem>>, vector<8x128xf32>
      tpu.vector_store %arg9[%c0_56, %c0_57], %79 {strides = array<i32>} : memref<8x128xf32, #tpu.memory_space<vmem>>, vector<8x128xf32>,
    } else {
    }
    %c0 = arith.constant 0 : index
    %c0_1 = arith.constant 0 : index
    %3 = vector.load %arg1[%c0, %c0_1] : memref<64x128xf32, #tpu.memory_space<vmem>>, vector<64x128xf32>
    %c0_2 = arith.constant 0 : index
    %c0_3 = arith.constant 0 : index
    %4 = vector.load %arg2[%c0_2, %c0_3] : memref<128x128xf32, #tpu.memory_space<vmem>>, vector<128x128xf32>
    %cst = arith.constant dense<0.000000e+00> : vector<64x128xf32>
    %5 = tpu.matmul %3, %4, %cst {dimension_numbers = #tpu.dot_dimension_numbers<[1], [0], [0], [1], [0, 0, 1, 1], [], []>} : vector<64x128xf32>, vector<128x128xf32>, vector<64x128xf32> -> vector<64x128xf32>
    %c0_4 = arith.constant 0 : index
    %c0_5 = arith.constant 0 : index
    %6 = vector.load %arg4[%c0_4, %c0_5] : memref<1x128xf32, #tpu.memory_space<vmem>>, vector<1x128xf32>
    %7 = vector.broadcast %6 : vector<1x128xf32> to vector<64x128xf32>
    %8 = arith.addf %5, %7 : vector<64x128xf32>
    %c0_6 = arith.constant 0 : index
    %c0_7 = arith.constant 0 : index
    %9 = vector.load %arg8[%c0_6, %c0_7] : memref<64x128xf32, #tpu.memory_space<vmem>>, vector<64x128xf32>
    tpu.vector_store %arg8[%c0_6, %c0_7], %8 {strides = array<i32>} : memref<64x128xf32, #tpu.memory_space<vmem>>, vector<64x128xf32>,
    %c0_8 = arith.constant 0 : index
    %c0_9 = arith.constant 0 : index
    %10 = vector.load %arg9[%c0_8, %c0_9] : memref<8x128xf32, #tpu.memory_space<vmem>>, vector<8x128xf32>
    %c0_i32_10 = arith.constant 0 : i32
    %c8_i32 = arith.constant 8 : i32
    %11 = arith.muli %c0_i32_10, %c8_i32 : i32
    %12 = tpu.assume_multiple %11, 8 : i32
    %13 = arith.index_cast %12 : i32 to index
    %c0_11 = arith.constant 0 : index
    %14 = vector.load %arg8[%13, %c0_11] : memref<64x128xf32, #tpu.memory_space<vmem>>, vector<8x128xf32>
    %c0_12 = arith.constant 0 : index
    %c0_13 = arith.constant 0 : index
    %15 = vector.load %arg3[%c0_12, %c0_13] : memref<128x128xf32, #tpu.memory_space<vmem>>, vector<128x128xf32>
    %cst_14 = arith.constant dense<0.000000e+00> : vector<8x128xf32>
    %16 = tpu.matmul %10, %15, %cst_14 {dimension_numbers = #tpu.dot_dimension_numbers<[1], [0], [0], [1], [0, 0, 1, 1], [], []>} : vector<8x128xf32>, vector<128x128xf32>, vector<8x128xf32> -> vector<8x128xf32>
    %17 = arith.addf %14, %16 : vector<8x128xf32>
    %18 = math.tanh %17 : vector<8x128xf32>
    %c1_i32 = arith.constant 1 : i32
    %c8_i32_15 = arith.constant 8 : i32
    %19 = arith.muli %c1_i32, %c8_i32_15 : i32
    %20 = tpu.assume_multiple %19, 8 : i32
    %21 = arith.index_cast %20 : i32 to index
    %c0_16 = arith.constant 0 : index
    %22 = vector.load %arg8[%21, %c0_16] : memref<64x128xf32, #tpu.memory_space<vmem>>, vector<8x128xf32>
    %c0_17 = arith.constant 0 : index
    %c0_18 = arith.constant 0 : index
    %23 = vector.load %arg3[%c0_17, %c0_18] : memref<128x128xf32, #tpu.memory_space<vmem>>, vector<128x128xf32>
    %cst_19 = arith.constant dense<0.000000e+00> : vector<8x128xf32>
    %24 = tpu.matmul %18, %23, %cst_19 {dimension_numbers = #tpu.dot_dimension_numbers<[1], [0], [0], [1], [0, 0, 1, 1], [], []>} : vector<8x128xf32>, vector<128x128xf32>, vector<8x128xf32> -> vector<8x128xf32>
    %25 = arith.addf %22, %24 : vector<8x128xf32>
    %26 = math.tanh %25 : vector<8x128xf32>
    %c2_i32 = arith.constant 2 : i32
    %c8_i32_20 = arith.constant 8 : i32
    %27 = arith.muli %c2_i32, %c8_i32_20 : i32
    %28 = tpu.assume_multiple %27, 8 : i32
    %29 = arith.index_cast %28 : i32 to index
    %c0_21 = arith.constant 0 : index
    %30 = vector.load %arg8[%29, %c0_21] : memref<64x128xf32, #tpu.memory_space<vmem>>, vector<8x128xf32>
    %c0_22 = arith.constant 0 : index
    %c0_23 = arith.constant 0 : index
    %31 = vector.load %arg3[%c0_22, %c0_23] : memref<128x128xf32, #tpu.memory_space<vmem>>, vector<128x128xf32>
    %cst_24 = arith.constant dense<0.000000e+00> : vector<8x128xf32>
    %32 = tpu.matmul %26, %31, %cst_24 {dimension_numbers = #tpu.dot_dimension_numbers<[1], [0], [0], [1], [0, 0, 1, 1], [], []>} : vector<8x128xf32>, vector<128x128xf32>, vector<8x128xf32> -> vector<8x128xf32>
    %33 = arith.addf %30, %32 : vector<8x128xf32>
    %34 = math.tanh %33 : vector<8x128xf32>
    %c3_i32 = arith.constant 3 : i32
    %c8_i32_25 = arith.constant 8 : i32
    %35 = arith.muli %c3_i32, %c8_i32_25 : i32
    %36 = tpu.assume_multiple %35, 8 : i32
    %37 = arith.index_cast %36 : i32 to index
    %c0_26 = arith.constant 0 : index
    %38 = vector.load %arg8[%37, %c0_26] : memref<64x128xf32, #tpu.memory_space<vmem>>, vector<8x128xf32>
    %c0_27 = arith.constant 0 : index
    %c0_28 = arith.constant 0 : index
    %39 = vector.load %arg3[%c0_27, %c0_28] : memref<128x128xf32, #tpu.memory_space<vmem>>, vector<128x128xf32>
    %cst_29 = arith.constant dense<0.000000e+00> : vector<8x128xf32>
    %40 = tpu.matmul %34, %39, %cst_29 {dimension_numbers = #tpu.dot_dimension_numbers<[1], [0], [0], [1], [0, 0, 1, 1], [], []>} : vector<8x128xf32>, vector<128x128xf32>, vector<8x128xf32> -> vector<8x128xf32>
    %41 = arith.addf %38, %40 : vector<8x128xf32>
    %42 = math.tanh %41 : vector<8x128xf32>
    %c4_i32 = arith.constant 4 : i32
    %c8_i32_30 = arith.constant 8 : i32
    %43 = arith.muli %c4_i32, %c8_i32_30 : i32
    %44 = tpu.assume_multiple %43, 8 : i32
    %45 = arith.index_cast %44 : i32 to index
    %c0_31 = arith.constant 0 : index
    %46 = vector.load %arg8[%45, %c0_31] : memref<64x128xf32, #tpu.memory_space<vmem>>, vector<8x128xf32>
    %c0_32 = arith.constant 0 : index
    %c0_33 = arith.constant 0 : index
    %47 = vector.load %arg3[%c0_32, %c0_33] : memref<128x128xf32, #tpu.memory_space<vmem>>, vector<128x128xf32>
    %cst_34 = arith.constant dense<0.000000e+00> : vector<8x128xf32>
    %48 = tpu.matmul %42, %47, %cst_34 {dimension_numbers = #tpu.dot_dimension_numbers<[1], [0], [0], [1], [0, 0, 1, 1], [], []>} : vector<8x128xf32>, vector<128x128xf32>, vector<8x128xf32> -> vector<8x128xf32>
    %49 = arith.addf %46, %48 : vector<8x128xf32>
    %50 = math.tanh %49 : vector<8x128xf32>
    %c5_i32 = arith.constant 5 : i32
    %c8_i32_35 = arith.constant 8 : i32
    %51 = arith.muli %c5_i32, %c8_i32_35 : i32
    %52 = tpu.assume_multiple %51, 8 : i32
    %53 = arith.index_cast %52 : i32 to index
    %c0_36 = arith.constant 0 : index
    %54 = vector.load %arg8[%53, %c0_36] : memref<64x128xf32, #tpu.memory_space<vmem>>, vector<8x128xf32>
    %c0_37 = arith.constant 0 : index
    %c0_38 = arith.constant 0 : index
    %55 = vector.load %arg3[%c0_37, %c0_38] : memref<128x128xf32, #tpu.memory_space<vmem>>, vector<128x128xf32>
    %cst_39 = arith.constant dense<0.000000e+00> : vector<8x128xf32>
    %56 = tpu.matmul %50, %55, %cst_39 {dimension_numbers = #tpu.dot_dimension_numbers<[1], [0], [0], [1], [0, 0, 1, 1], [], []>} : vector<8x128xf32>, vector<128x128xf32>, vector<8x128xf32> -> vector<8x128xf32>
    %57 = arith.addf %54, %56 : vector<8x128xf32>
    %58 = math.tanh %57 : vector<8x128xf32>
    %c6_i32 = arith.constant 6 : i32
    %c8_i32_40 = arith.constant 8 : i32
    %59 = arith.muli %c6_i32, %c8_i32_40 : i32
    %60 = tpu.assume_multiple %59, 8 : i32
    %61 = arith.index_cast %60 : i32 to index
    %c0_41 = arith.constant 0 : index
    %62 = vector.load %arg8[%61, %c0_41] : memref<64x128xf32, #tpu.memory_space<vmem>>, vector<8x128xf32>
    %c0_42 = arith.constant 0 : index
    %c0_43 = arith.constant 0 : index
    %63 = vector.load %arg3[%c0_42, %c0_43] : memref<128x128xf32, #tpu.memory_space<vmem>>, vector<128x128xf32>
    %cst_44 = arith.constant dense<0.000000e+00> : vector<8x128xf32>
    %64 = tpu.matmul %58, %63, %cst_44 {dimension_numbers = #tpu.dot_dimension_numbers<[1], [0], [0], [1], [0, 0, 1, 1], [], []>} : vector<8x128xf32>, vector<128x128xf32>, vector<8x128xf32> -> vector<8x128xf32>
    %65 = arith.addf %62, %64 : vector<8x128xf32>
    %66 = math.tanh %65 : vector<8x128xf32>
    %c7_i32 = arith.constant 7 : i32
    %c8_i32_45 = arith.constant 8 : i32
    %67 = arith.muli %c7_i32, %c8_i32_45 : i32
    %68 = tpu.assume_multiple %67, 8 : i32
    %69 = arith.index_cast %68 : i32 to index
    %c0_46 = arith.constant 0 : index
    %70 = vector.load %arg8[%69, %c0_46] : memref<64x128xf32, #tpu.memory_space<vmem>>, vector<8x128xf32>
    %c0_47 = arith.constant 0 : index
    %c0_48 = arith.constant 0 : index
    %71 = vector.load %arg3[%c0_47, %c0_48] : memref<128x128xf32, #tpu.memory_space<vmem>>, vector<128x128xf32>
    %cst_49 = arith.constant dense<0.000000e+00> : vector<8x128xf32>
    %72 = tpu.matmul %66, %71, %cst_49 {dimension_numbers = #tpu.dot_dimension_numbers<[1], [0], [0], [1], [0, 0, 1, 1], [], []>} : vector<8x128xf32>, vector<128x128xf32>, vector<8x128xf32> -> vector<8x128xf32>
    %73 = arith.addf %70, %72 : vector<8x128xf32>
    %74 = math.tanh %73 : vector<8x128xf32>
    %c8_i32_50 = arith.constant 8 : i32
    %c0_51 = arith.constant 0 : index
    %c0_52 = arith.constant 0 : index
    %75 = vector.load %arg9[%c0_51, %c0_52] : memref<8x128xf32, #tpu.memory_space<vmem>>, vector<8x128xf32>
    tpu.vector_store %arg9[%c0_51, %c0_52], %74 {strides = array<i32>} : memref<8x128xf32, #tpu.memory_space<vmem>>, vector<8x128xf32>,
    %c0_i32_53 = arith.constant 0 : i32
    %76 = arith.cmpi eq, %arg0, %c0_i32_53 : i32
    %77 = arith.extui %76 : i1 to i32
    %c0_i32_54 = arith.constant 0 : i32
    %78 = arith.cmpi ne, %77, %c0_i32_54 : i32
    scf.if %78 {
      %c0_55 = arith.constant 0 : index
      %c0_56 = arith.constant 0 : index
      %79 = vector.load %arg5[%c0_55, %c0_56] : memref<128x128xf32, #tpu.memory_space<vmem>>, vector<128x128xf32>
      %cst_57 = arith.constant dense<0.000000e+00> : vector<8x128xf32>
      %80 = tpu.matmul %74, %79, %cst_57 {dimension_numbers = #tpu.dot_dimension_numbers<[1], [0], [0], [1], [0, 0, 1, 1], [], []>} : vector<8x128xf32>, vector<128x128xf32>, vector<8x128xf32> -> vector<8x128xf32>
      %c0_58 = arith.constant 0 : index
      %c0_59 = arith.constant 0 : index
      %81 = vector.load %arg6[%c0_58, %c0_59] : memref<1x128xf32, #tpu.memory_space<vmem>>, vector<1x128xf32>
      %82 = vector.broadcast %81 : vector<1x128xf32> to vector<8x128xf32>
      %83 = arith.addf %80, %82 : vector<8x128xf32>
      %c0_60 = arith.constant 0 : index
      %c0_61 = arith.constant 0 : index
      %84 = vector.load %arg7[%c0_60, %c0_61] : memref<8x128xf32, #tpu.memory_space<vmem>>, vector<8x128xf32>
      tpu.vector_store %arg7[%c0_60, %c0_61], %83 {strides = array<i32>} : memref<8x128xf32, #tpu.memory_space<vmem>>, vector<8x128xf32>,
    } else {
    }
    return
  }
  func.func @transform_0(%arg0: i32) -> (i32, i32) {
    %c0_i32 = arith.constant 0 : i32
    %c0_i32_0 = arith.constant 0 : i32
    return %arg0, %c0_i32 : i32, i32
  }
  func.func @transform_1(%arg0: i32) -> (i32, i32) {
    %c0_i32 = arith.constant 0 : i32
    %c0_i32_0 = arith.constant 0 : i32
    %c0_i32_1 = arith.constant 0 : i32
    return %c0_i32, %c0_i32_0 : i32, i32
  }
  func.func @transform_2(%arg0: i32) -> (i32, i32) {
    %c0_i32 = arith.constant 0 : i32
    %c0_i32_0 = arith.constant 0 : i32
    %c0_i32_1 = arith.constant 0 : i32
    return %c0_i32, %c0_i32_0 : i32, i32
  }
  func.func @transform_3(%arg0: i32) -> (i32, i32) {
    %c0_i32 = arith.constant 0 : i32
    %c0_i32_0 = arith.constant 0 : i32
    %c0_i32_1 = arith.constant 0 : i32
    return %c0_i32, %c0_i32_0 : i32, i32
  }
  func.func @transform_4(%arg0: i32) -> (i32, i32) {
    %c0_i32 = arith.constant 0 : i32
    %c0_i32_0 = arith.constant 0 : i32
    %c0_i32_1 = arith.constant 0 : i32
    return %c0_i32, %c0_i32_0 : i32, i32
  }
  func.func @transform_5(%arg0: i32) -> (i32, i32) {
    %c0_i32 = arith.constant 0 : i32
    %c0_i32_0 = arith.constant 0 : i32
    %c0_i32_1 = arith.constant 0 : i32
    return %c0_i32, %c0_i32_0 : i32, i32
  }
  func.func @transform_6(%arg0: i32) -> (i32, i32) {
    %c0_i32 = arith.constant 0 : i32
    %c0_i32_0 = arith.constant 0 : i32
    %c0_i32_1 = arith.constant 0 : i32
    return %c0_i32, %c0_i32_0 : i32, i32
  }
}

</mosaic_0001>

<llo_original>
// kernel: rnn_model_forward.1
$region0: #{rnn_model_forward.1}
  #allocation0 [shape = 'u32[]', space=smem, size = 0x4, offset = 0x4, fixed_abs, tag = 'smem constant byte address 0x4 - core index']
  #allocation1 [shape = 'u32[72,128]{1,0:T(1,128)}', space=vmem, size = 0x9000, scoped, tag = 'internal scratch']
  #allocation2 [shape = 'f32[64,128]{1,0:T(8,128)}', space=vmem, size = 0x8000, scoped, tag = 'scratch operand']
  #allocation3 [shape = 'f32[8,128]{1,0:T(8,128)}', space=vmem, size = 0x1000, scoped, tag = 'scratch operand']
  %s0 = inlined_call_operand.vmem [shape: f32[64,128], index: 0, kind: input, shape index: {}]
  %s1 = inlined_call_operand.vmem [shape: f32[128,128], index: 1, kind: input, shape index: {}]
  %s2 = inlined_call_operand.vmem [shape: f32[128,128], index: 2, kind: input, shape index: {}]
  %s3 = inlined_call_operand.vmem [shape: f32[1,128], index: 3, kind: input, shape index: {}]
  %s4 = inlined_call_operand.vmem [shape: f32[128,128], index: 4, kind: input, shape index: {}]
  %s5 = inlined_call_operand.vmem [shape: f32[1,128], index: 5, kind: input, shape index: {}]
  %s6 = inlined_call_operand.vmem [shape: f32[8,128], index: 6, kind: output, shape index: {}]
  %s7 = sld [smem:[#allocation0]]
  $region42: #{rnn_model_forward.1} parent=0
    _
  %s9 = ssub.s32 1, %s7
  %s10 = scalar_select 0, %s9, %s7
  // Predicated region
  $region2: #{rnn_model_forward.1} parent=0 // pred_check
    _
  $region3: #{rnn_model_forward.1} parent=0 // pred_check_branch
    %12 = sbr.rel (0) target = $region5
  $region4: #{rnn_model_forward.1} parent=0 // pred_region
    _
  $region5: #{rnn_model_forward.1} parent=0 // pred_fallthru
    _
  // Predicated region
  $region6: #{rnn_model_forward.1} parent=0 // pred_check
    _
  $region7: #{rnn_model_forward.1} parent=0 // pred_check_branch
    %14 = sbr.rel (0) target = $region9
  $region8: #{rnn_model_forward.1} parent=0 // pred_region
    _
  $region9: #{rnn_model_forward.1} parent=0 // pred_fallthru
    _
  // Predicated region
  $region10: #{rnn_model_forward.1} parent=0 // pred_check
    _
  $region11: #{rnn_model_forward.1} parent=0 // pred_check_branch
    %16 = sbr.rel (0) target = $region13
  $region12: #{rnn_model_forward.1} parent=0 // pred_region
    _
  $region13: #{rnn_model_forward.1} parent=0 // pred_fallthru
    _
  // Predicated region
  $region14: #{rnn_model_forward.1} parent=0 // pred_check
    _
  $region15: #{rnn_model_forward.1} parent=0 // pred_check_branch
    %18 = sbr.rel (0) target = $region17
  $region16: #{rnn_model_forward.1} parent=0 // pred_region
    _
  $region17: #{rnn_model_forward.1} parent=0 // pred_fallthru
    _
  // Predicated region
  $region18: #{rnn_model_forward.1} parent=0 // pred_check
    _
  $region19: #{rnn_model_forward.1} parent=0 // pred_check_branch
    %20 = sbr.rel (0) target = $region21
  $region20: #{rnn_model_forward.1} parent=0 // pred_region
    _
  $region21: #{rnn_model_forward.1} parent=0 // pred_fallthru
    _
  // Predicated region
  $region22: #{rnn_model_forward.1} parent=0 // pred_check
    _
  $region23: #{rnn_model_forward.1} parent=0 // pred_check_branch
    %22 = sbr.rel (0) target = $region25
  $region24: #{rnn_model_forward.1} parent=0 // pred_region
    _
  $region25: #{rnn_model_forward.1} parent=0 // pred_fallthru
    _
  %p23 = scmp.eq.s32.totalorder 0, 0
  // Predicated region
  $region26: #{rnn_model_forward.1} parent=0 // pred_check
    %p24 = pneg %p23
  $region27: #{rnn_model_forward.1} parent=0 // pred_check_branch
    %26 = sbr.rel (%p24) target = $region29
  $region28: #{rnn_model_forward.1} parent=0 // pred_region
    %27 = vst [vmem:[#allocation3] sm:$0xff] 0.0
  $region29: #{rnn_model_forward.1} parent=0 // pred_fallthru
    _
  %v28 = vld [vmem:[%s0] sm:$0xff]
  %v29 = vld [vmem:[%s0 + $0x8] sm:$0xff]
  %v30 = vld [vmem:[%s0 + $0x10] sm:$0xff]
  %v31 = vld [vmem:[%s0 + $0x18] sm:$0xff]
  %v32 = vld [vmem:[%s0 + $0x20] sm:$0xff]
  %v33 = vld [vmem:[%s0 + $0x28] sm:$0xff]
  %v34 = vld [vmem:[%s0 + $0x30] sm:$0xff]
  %v35 = vld [vmem:[%s0 + $0x38] sm:$0xff]
  %v36 = vld [vmem:[%s1] sm:$0xff]
  %v37 = vld [vmem:[%s1 + $0x8] sm:$0xff]
  %v38 = vld [vmem:[%s1 + $0x10] sm:$0xff]
  %v39 = vld [vmem:[%s1 + $0x18] sm:$0xff]
  %v40 = vld [vmem:[%s1 + $0x20] sm:$0xff]
  %v41 = vld [vmem:[%s1 + $0x28] sm:$0xff]
  %v42 = vld [vmem:[%s1 + $0x30] sm:$0xff]
  %v43 = vld [vmem:[%s1 + $0x38] sm:$0xff]
  %v44 = vld [vmem:[%s1 + $0x40] sm:$0xff]
  %v45 = vld [vmem:[%s1 + $0x48] sm:$0xff]
  %v46 = vld [vmem:[%s1 + $0x50] sm:$0xff]
  %v47 = vld [vmem:[%s1 + $0x58] sm:$0xff]
  %v48 = vld [vmem:[%s1 + $0x60] sm:$0xff]
  %v49 = vld [vmem:[%s1 + $0x68] sm:$0xff]
  %v50 = vld [vmem:[%s1 + $0x70] sm:$0xff]
  %v51 = vld [vmem:[%s1 + $0x78] sm:$0xff]
  %v52 = vld [vmem:[%s3] sm:$0x1]
  %v54 = vperm.slane %v52, 0
  %56 = vmatpush.msra.mxu0 %v51
  %57 = vmatpush.msra.mxu0 %v50
  %58 = vmatpush.msra.mxu0 %v49
  %59 = vmatpush.msra.mxu0 %v48
  %60 = vmatpush.msra.mxu0 %v47
  %61 = vmatpush.msra.mxu0 %v46
  %62 = vmatpush.msra.mxu0 %v45
  %63 = vmatpush.msra.mxu0 %v44
  %64 = vmatpush.msra.mxu0 %v43
  %65 = vmatpush.msra.mxu0 %v42
  %66 = vmatpush.msra.mxu0 %v41
  %67 = vmatpush.msra.mxu0 %v40
  %68 = vmatpush.msra.mxu0 %v39
  %69 = vmatpush.msra.mxu0 %v38
  %70 = vmatpush.msra.mxu0 %v37
  %71 = vmatpush.msra.mxu0 %v36
  %72 = vmatmul.f32.gmra.mxu0 %v28
  %v73 = vpop.f32.mrf.mxu0
  %v74 = vadd.f32 %v54, %v73
  %75 = vmatmul.f32.gmra.mxu0 %v29
  %v76 = vpop.f32.mrf.mxu0
  %v77 = vadd.f32 %v54, %v76
  %78 = vmatmul.f32.gmra.mxu0 %v30
  %v79 = vpop.f32.mrf.mxu0
  %v80 = vadd.f32 %v54, %v79
  %81 = vmatmul.f32.gmra.mxu0 %v31
  %v82 = vpop.f32.mrf.mxu0
  %v83 = vadd.f32 %v54, %v82
  %84 = vmatmul.f32.gmra.mxu0 %v32
  %v85 = vpop.f32.mrf.mxu0
  %v86 = vadd.f32 %v54, %v85
  %87 = vmatmul.f32.gmra.mxu0 %v33
  %v88 = vpop.f32.mrf.mxu0
  %v89 = vadd.f32 %v54, %v88
  %90 = vmatmul.f32.gmra.mxu0 %v34
  %v91 = vpop.f32.mrf.mxu0
  %v92 = vadd.f32 %v54, %v91
  %93 = vmatmul.f32.gmra.mxu0 %v35
  %v94 = vpop.f32.mrf.mxu0
  %v95 = vadd.f32 %v54, %v94
  %96 = vdwg.mxu0
  %97 = vst [vmem:[#allocation2] sm:$0xff] %v74
  %98 = vst [vmem:[#allocation2 + $0x8] sm:$0xff] %v77
  %99 = vst [vmem:[#allocation2 + $0x10] sm:$0xff] %v80
  %100 = vst [vmem:[#allocation2 + $0x18] sm:$0xff] %v83
  %101 = vst [vmem:[#allocation2 + $0x20] sm:$0xff] %v86
  %102 = vst [vmem:[#allocation2 + $0x28] sm:$0xff] %v89
  %103 = vst [vmem:[#allocation2 + $0x30] sm:$0xff] %v92
  %104 = vst [vmem:[#allocation2 + $0x38] sm:$0xff] %v95
  %v105 = vld [vmem:[#allocation3] sm:$0xff]
  %v106 = vld [vmem:[#allocation2] sm:$0xff]
  %v107 = vld [vmem:[%s2] sm:$0xff]
  %v108 = vld [vmem:[%s2 + $0x8] sm:$0xff]
  %v109 = vld [vmem:[%s2 + $0x10] sm:$0xff]
  %v110 = vld [vmem:[%s2 + $0x18] sm:$0xff]
  %v111 = vld [vmem:[%s2 + $0x20] sm:$0xff]
  %v112 = vld [vmem:[%s2 + $0x28] sm:$0xff]
  %v113 = vld [vmem:[%s2 + $0x30] sm:$0xff]
  %v114 = vld [vmem:[%s2 + $0x38] sm:$0xff]
  %v115 = vld [vmem:[%s2 + $0x40] sm:$0xff]
  %v116 = vld [vmem:[%s2 + $0x48] sm:$0xff]
  %v117 = vld [vmem:[%s2 + $0x50] sm:$0xff]
  %v118 = vld [vmem:[%s2 + $0x58] sm:$0xff]
  %v119 = vld [vmem:[%s2 + $0x60] sm:$0xff]
  %v120 = vld [vmem:[%s2 + $0x68] sm:$0xff]
  %v121 = vld [vmem:[%s2 + $0x70] sm:$0xff]
  %v122 = vld [vmem:[%s2 + $0x78] sm:$0xff]
  %123 = vmatpush.msra.mxu0 %v122
  %124 = vmatpush.msra.mxu0 %v121
  %125 = vmatpush.msra.mxu0 %v120
  %126 = vmatpush.msra.mxu0 %v119
  %127 = vmatpush.msra.mxu0 %v118
  %128 = vmatpush.msra.mxu0 %v117
  %129 = vmatpush.msra.mxu0 %v116
  %130 = vmatpush.msra.mxu0 %v115
  %131 = vmatpush.msra.mxu0 %v114
  %132 = vmatpush.msra.mxu0 %v113
  %133 = vmatpush.msra.mxu0 %v112
  %134 = vmatpush.msra.mxu0 %v111
  %135 = vmatpush.msra.mxu0 %v110
  %136 = vmatpush.msra.mxu0 %v109
  %137 = vmatpush.msra.mxu0 %v108
  %138 = vmatpush.msra.mxu0 %v107
  %139 = vmatmul.f32.gmra.mxu0 %v105
  %v140 = vpop.f32.mrf.mxu0
  %v141 = vadd.f32 0.0, %v140
  %142 = vdwg.mxu0
  %v143 = vadd.f32 %v106, %v141
  %v144 = vtanh.pop %v143
  %s145 = scalar_lea.vmem [#allocation2], 8
  %v146 = vld [vmem:[%s145] sm:$0xff]
  %147 = vmatpush.msra.mxu0 %v122
  %148 = vmatpush.msra.mxu0 %v121
  %149 = vmatpush.msra.mxu0 %v120
  %150 = vmatpush.msra.mxu0 %v119
  %151 = vmatpush.msra.mxu0 %v118
  %152 = vmatpush.msra.mxu0 %v117
  %153 = vmatpush.msra.mxu0 %v116
  %154 = vmatpush.msra.mxu0 %v115
  %155 = vmatpush.msra.mxu0 %v114
  %156 = vmatpush.msra.mxu0 %v113
  %157 = vmatpush.msra.mxu0 %v112
  %158 = vmatpush.msra.mxu0 %v111
  %159 = vmatpush.msra.mxu0 %v110
  %160 = vmatpush.msra.mxu0 %v109
  %161 = vmatpush.msra.mxu0 %v108
  %162 = vmatpush.msra.mxu0 %v107
  %163 = vmatmul.f32.gmra.mxu0 %v144
  %v164 = vpop.f32.mrf.mxu0
  %v165 = vadd.f32 0.0, %v164
  %166 = vdwg.mxu0
  %v167 = vadd.f32 %v146, %v165
  %v168 = vtanh.pop %v167
  %s169 = scalar_lea.vmem [#allocation2], 16
  %v170 = vld [vmem:[%s169] sm:$0xff]
  %171 = vmatpush.msra.mxu0 %v122
  %172 = vmatpush.msra.mxu0 %v121
  %173 = vmatpush.msra.mxu0 %v120
  %174 = vmatpush.msra.mxu0 %v119
  %175 = vmatpush.msra.mxu0 %v118
  %176 = vmatpush.msra.mxu0 %v117
  %177 = vmatpush.msra.mxu0 %v116
  %178 = vmatpush.msra.mxu0 %v115
  %179 = vmatpush.msra.mxu0 %v114
  %180 = vmatpush.msra.mxu0 %v113
  %181 = vmatpush.msra.mxu0 %v112
  %182 = vmatpush.msra.mxu0 %v111
  %183 = vmatpush.msra.mxu0 %v110
  %184 = vmatpush.msra.mxu0 %v109
  %185 = vmatpush.msra.mxu0 %v108
  %186 = vmatpush.msra.mxu0 %v107
  %187 = vmatmul.f32.gmra.mxu0 %v168
  %v188 = vpop.f32.mrf.mxu0
  %v189 = vadd.f32 0.0, %v188
  %190 = vdwg.mxu0
  %v191 = vadd.f32 %v170, %v189
  %v192 = vtanh.pop %v191
  %s193 = scalar_lea.vmem [#allocation2], 24
  %v194 = vld [vmem:[%s193] sm:$0xff]
  %195 = vmatpush.msra.mxu0 %v122
  %196 = vmatpush.msra.mxu0 %v121
  %197 = vmatpush.msra.mxu0 %v120
  %198 = vmatpush.msra.mxu0 %v119
  %199 = vmatpush.msra.mxu0 %v118
  %200 = vmatpush.msra.mxu0 %v117
  %201 = vmatpush.msra.mxu0 %v116
  %202 = vmatpush.msra.mxu0 %v115
  %203 = vmatpush.msra.mxu0 %v114
  %204 = vmatpush.msra.mxu0 %v113
  %205 = vmatpush.msra.mxu0 %v112
  %206 = vmatpush.msra.mxu0 %v111
  %207 = vmatpush.msra.mxu0 %v110
  %208 = vmatpush.msra.mxu0 %v109
  %209 = vmatpush.msra.mxu0 %v108
  %210 = vmatpush.msra.mxu0 %v107
  %211 = vmatmul.f32.gmra.mxu0 %v192
  %v212 = vpop.f32.mrf.mxu0
  %v213 = vadd.f32 0.0, %v212
  %214 = vdwg.mxu0
  %v215 = vadd.f32 %v194, %v213
  %v216 = vtanh.pop %v215
  %s217 = scalar_lea.vmem [#allocation2], 32
  %v218 = vld [vmem:[%s217] sm:$0xff]
  %219 = vmatpush.msra.mxu0 %v122
  %220 = vmatpush.msra.mxu0 %v121
  %221 = vmatpush.msra.mxu0 %v120
  %222 = vmatpush.msra.mxu0 %v119
  %223 = vmatpush.msra.mxu0 %v118
  %224 = vmatpush.msra.mxu0 %v117
  %225 = vmatpush.msra.mxu0 %v116
  %226 = vmatpush.msra.mxu0 %v115
  %227 = vmatpush.msra.mxu0 %v114
  %228 = vmatpush.msra.mxu0 %v113
  %229 = vmatpush.msra.mxu0 %v112
  %230 = vmatpush.msra.mxu0 %v111
  %231 = vmatpush.msra.mxu0 %v110
  %232 = vmatpush.msra.mxu0 %v109
  %233 = vmatpush.msra.mxu0 %v108
  %234 = vmatpush.msra.mxu0 %v107
  %235 = vmatmul.f32.gmra.mxu0 %v216
  %v236 = vpop.f32.mrf.mxu0
  %v237 = vadd.f32 0.0, %v236
  %238 = vdwg.mxu0
  %v239 = vadd.f32 %v218, %v237
  %v240 = vtanh.pop %v239
  %s241 = scalar_lea.vmem [#allocation2], 40
  %v242 = vld [vmem:[%s241] sm:$0xff]
  %243 = vmatpush.msra.mxu0 %v122
  %244 = vmatpush.msra.mxu0 %v121
  %245 = vmatpush.msra.mxu0 %v120
  %246 = vmatpush.msra.mxu0 %v119
  %247 = vmatpush.msra.mxu0 %v118
  %248 = vmatpush.msra.mxu0 %v117
  %249 = vmatpush.msra.mxu0 %v116
  %250 = vmatpush.msra.mxu0 %v115
  %251 = vmatpush.msra.mxu0 %v114
  %252 = vmatpush.msra.mxu0 %v113
  %253 = vmatpush.msra.mxu0 %v112
  %254 = vmatpush.msra.mxu0 %v111
  %255 = vmatpush.msra.mxu0 %v110
  %256 = vmatpush.msra.mxu0 %v109
  %257 = vmatpush.msra.mxu0 %v108
  %258 = vmatpush.msra.mxu0 %v107
  %259 = vmatmul.f32.gmra.mxu0 %v240
  %v260 = vpop.f32.mrf.mxu0
  %v261 = vadd.f32 0.0, %v260
  %262 = vdwg.mxu0
  %v263 = vadd.f32 %v242, %v261
  %v264 = vtanh.pop %v263
  %s265 = scalar_lea.vmem [#allocation2], 48
  %v266 = vld [vmem:[%s265] sm:$0xff]
  %267 = vmatpush.msra.mxu0 %v122
  %268 = vmatpush.msra.mxu0 %v121
  %269 = vmatpush.msra.mxu0 %v120
  %270 = vmatpush.msra.mxu0 %v119
  %271 = vmatpush.msra.mxu0 %v118
  %272 = vmatpush.msra.mxu0 %v117
  %273 = vmatpush.msra.mxu0 %v116
  %274 = vmatpush.msra.mxu0 %v115
  %275 = vmatpush.msra.mxu0 %v114
  %276 = vmatpush.msra.mxu0 %v113
  %277 = vmatpush.msra.mxu0 %v112
  %278 = vmatpush.msra.mxu0 %v111
  %279 = vmatpush.msra.mxu0 %v110
  %280 = vmatpush.msra.mxu0 %v109
  %281 = vmatpush.msra.mxu0 %v108
  %282 = vmatpush.msra.mxu0 %v107
  %283 = vmatmul.f32.gmra.mxu0 %v264
  %v284 = vpop.f32.mrf.mxu0
  %v285 = vadd.f32 0.0, %v284
  %286 = vdwg.mxu0
  %v287 = vadd.f32 %v266, %v285
  %v288 = vtanh.pop %v287
  %s289 = scalar_lea.vmem [#allocation2], 56
  %v290 = vld [vmem:[%s289] sm:$0xff]
  %291 = vmatpush.msra.mxu0 %v122
  %292 = vmatpush.msra.mxu0 %v121
  %293 = vmatpush.msra.mxu0 %v120
  %294 = vmatpush.msra.mxu0 %v119
  %295 = vmatpush.msra.mxu0 %v118
  %296 = vmatpush.msra.mxu0 %v117
  %297 = vmatpush.msra.mxu0 %v116
  %298 = vmatpush.msra.mxu0 %v115
  %299 = vmatpush.msra.mxu0 %v114
  %300 = vmatpush.msra.mxu0 %v113
  %301 = vmatpush.msra.mxu0 %v112
  %302 = vmatpush.msra.mxu0 %v111
  %303 = vmatpush.msra.mxu0 %v110
  %304 = vmatpush.msra.mxu0 %v109
  %305 = vmatpush.msra.mxu0 %v108
  %306 = vmatpush.msra.mxu0 %v107
  %307 = vmatmul.f32.gmra.mxu0 %v288
  %v308 = vpop.f32.mrf.mxu0
  %v309 = vadd.f32 0.0, %v308
  %310 = vdwg.mxu0
  %v311 = vadd.f32 %v290, %v309
  %v312 = vtanh.pop %v311
  %313 = vst [vmem:[#allocation3] sm:$0xff] %v312
  // Predicated region
  $region30: #{rnn_model_forward.1} parent=0 // pred_check
    %p314 = pneg %p23
  $region31: #{rnn_model_forward.1} parent=0 // pred_check_branch
    %316 = sbr.rel (%p314) target = $region33
  $region32: #{rnn_model_forward.1} parent=0 // pred_region
    %v317 = vld [vmem:[%s4] sm:$0xff]
    %v318 = vld [vmem:[%s4 + $0x8] sm:$0xff]
    %v319 = vld [vmem:[%s4 + $0x10] sm:$0xff]
    %v320 = vld [vmem:[%s4 + $0x18] sm:$0xff]
    %v321 = vld [vmem:[%s4 + $0x20] sm:$0xff]
    %v322 = vld [vmem:[%s4 + $0x28] sm:$0xff]
    %v323 = vld [vmem:[%s4 + $0x30] sm:$0xff]
    %v324 = vld [vmem:[%s4 + $0x38] sm:$0xff]
    %v325 = vld [vmem:[%s4 + $0x40] sm:$0xff]
    %v326 = vld [vmem:[%s4 + $0x48] sm:$0xff]
    %v327 = vld [vmem:[%s4 + $0x50] sm:$0xff]
    %v328 = vld [vmem:[%s4 + $0x58] sm:$0xff]
    %v329 = vld [vmem:[%s4 + $0x60] sm:$0xff]
    %v330 = vld [vmem:[%s4 + $0x68] sm:$0xff]
    %v331 = vld [vmem:[%s4 + $0x70] sm:$0xff]
    %v332 = vld [vmem:[%s4 + $0x78] sm:$0xff]
    %v333 = vld [vmem:[%s5] sm:$0x1]
    %v335 = vperm.slane %v333, 0
    %337 = vmatpush.msra.mxu0 %v332
    %338 = vmatpush.msra.mxu0 %v331
    %339 = vmatpush.msra.mxu0 %v330
    %340 = vmatpush.msra.mxu0 %v329
    %341 = vmatpush.msra.mxu0 %v328
    %342 = vmatpush.msra.mxu0 %v327
    %343 = vmatpush.msra.mxu0 %v326
    %344 = vmatpush.msra.mxu0 %v325
    %345 = vmatpush.msra.mxu0 %v324
    %346 = vmatpush.msra.mxu0 %v323
    %347 = vmatpush.msra.mxu0 %v322
    %348 = vmatpush.msra.mxu0 %v321
    %349 = vmatpush.msra.mxu0 %v320
    %350 = vmatpush.msra.mxu0 %v319
    %351 = vmatpush.msra.mxu0 %v318
    %352 = vmatpush.msra.mxu0 %v317
    %353 = vmatmul.f32.gmra.mxu0 %v312
    %v354 = vpop.f32.mrf.mxu0
    %v355 = vadd.f32 %v335, %v354
    %356 = vdwg.mxu0
    %357 = vst [vmem:[%s6] sm:$0xff] %v355
  $region33: #{rnn_model_forward.1} parent=0 // pred_fallthru
    _
  // Predicated region
  $region34: #{rnn_model_forward.1} parent=0 // pred_check
    _
  $region35: #{rnn_model_forward.1} parent=0 // pred_check_branch
    %359 = sbr.rel (0) target = $region37
  $region36: #{rnn_model_forward.1} parent=0 // pred_region
    _
  $region37: #{rnn_model_forward.1} parent=0 // pred_fallthru
    _
  // Predicated region
  $region38: #{rnn_model_forward.1} parent=0 // pred_check
    _
  $region39: #{rnn_model_forward.1} parent=0 // pred_check_branch
    %361 = sbr.rel (0) target = $region41
  $region40: #{rnn_model_forward.1} parent=0 // pred_region
    _
  $region41: #{rnn_model_forward.1} parent=0 // pred_fallthru
    _

</llo_original>
